<compile_context>
chip_gen: v7x
topology: tpu7x:2x2x1
jax: 0.10.0
libtpu: 0.0.40
codegen_flags: <defaults>
</compile_context>

<pallas_src>
import jax
import jax.numpy as jnp
from jax.experimental import pallas as pl
from jax.experimental.pallas import tpu as pltpu

_MIB = 1024 * 1024
_LANE_WIDTHS = (4096, 2048, 1024, 512, 256, 128)   # lane-dense widths, widest first
_SUBLANE_GRANULE = 32                               # dense for f32(8)/bf16(16)/int8(32)


def _scale_kernel(scale_ref, x_ref, o_ref):
    # scale_ref: (1,) f32 in SMEM; x_ref / o_ref: (block_rows, width) VMEM tiles.
    o_ref[...] = (x_ref[...] * scale_ref[0]).astype(o_ref.dtype)


def _target_block_bytes() -> int:
    """Per-block byte budget, generation aware.

    v7x (64 MiB VMEM/TC, ~3.2 TB/s HBM) wants ~8 MiB blocks so the fixed
    per-grid-step overhead stays <~5% of the read+write time; 4 MiB is plenty
    on v5e/v6e.  Double-buffered in+out footprint is 4x this value.
    """
    try:
        info = pltpu.get_tpu_info()
        vmem = getattr(info, "vmem_capacity_bytes", None)
        if vmem is not None and vmem <= 96 * _MIB:   # v7x-class TensorCore
            return 8 * _MIB
    except Exception:
        pass
    return 4 * _MIB


def _pick_width(n: int) -> int:
    """Largest lane-dense width dividing n, preferring row counts that fill
    whole sublane granules (keeps DMAs and stores fully dense)."""
    divisors = [w for w in _LANE_WIDTHS if n % w == 0]
    for w in divisors:                      # widest width with >= 32 rows
        if n // w >= _SUBLANE_GRANULE:
            return w
    for w in divisors:                      # widest width with >= 8 rows (f32 sublane)
        if n // w >= 8:
            return w
    return divisors[0]                      # tiny array: anything goes


def _pick_block_rows(rows: int, width: int, itemsize: int, block_bytes: int) -> int:
    g = _SUBLANE_GRANULE
    target = max(g, (block_bytes // (width * itemsize)) // g * g)

    if rows <= target:
        # Whole array fits one block.  If it is big enough to be worth
        # splitting, use two blocks so the "parallel" grid axis engages both
        # v7x TensorCores (and improves DMA/compute pipelining elsewhere).
        if rows >= 2 * g:
            half = ((rows + 1) // 2 + g - 1) // g * g
            if half < rows:
                return half
        return rows

    # Multi-block: prefer a granule-multiple block size that evenly divides
    # rows so every grid step is a full, unmasked tile.  Don't shrink below
    # half the target just to get an even split.
    for br in range(target, max(g, target // 2) - 1, -g):
        if rows % br == 0:
            return br
    return target


def scale_layer(x: jax.Array, scale: jax.Array, *, donate_input: bool = False) -> jax.Array:
    """out = x * scale (scale is a learnable scalar, shape (1,) or ())."""
    orig_shape = x.shape
    dtype = x.dtype
    n = x.size
    itemsize = jnp.dtype(dtype).itemsize
    scale_f32 = jnp.asarray(scale, jnp.float32).reshape(1)

    if n == 0:
        return x

    xf = x.reshape(-1)                      # free for contiguous arrays
    n_tail = n % 128
    n_main = n - n_tail

    if n_main == 0:
        # Fewer than 128 elements: not worth a kernel launch.
        return (xf.astype(jnp.float32) * scale_f32[0]).astype(dtype).reshape(orig_shape)

    width = _pick_width(n_main)
    rows = n_main // width
    block_rows = _pick_block_rows(rows, width, itemsize, _target_block_bytes())
    grid = (pl.cdiv(rows, block_rows),)

    x2d = xf[:n_main].reshape(rows, width)

    # VMEM budget: double-buffered input + output blocks plus a small margin.
    block_bytes_actual = block_rows * width * itemsize
    vmem_limit = min(128 * _MIB, 4 * block_bytes_actual + 4 * _MIB)

    out2d = pl.pallas_call(
        _scale_kernel,
        out_shape=jax.ShapeDtypeStruct((rows, width), dtype),
        grid=grid,
        in_specs=[
            # Scalar parameter lives in SMEM, shared by every grid step.
            pl.BlockSpec(memory_space=pltpu.SMEM),
            pl.BlockSpec((block_rows, width), lambda i: (i, 0)),
        ],
        out_specs=pl.BlockSpec((block_rows, width), lambda i: (i, 0)),
        compiler_params=pltpu.CompilerParams(
            dimension_semantics=("parallel",),    # shards grid across v7x's 2 TCs
            vmem_limit_bytes=int(vmem_limit),
        ),
        cost_estimate=pl.CostEstimate(
            flops=n_main, transcendentals=0, bytes_accessed=2 * n_main * itemsize),
        input_output_aliases=({1: 0} if donate_input else {}),
    )(scale_f32, x2d)

    out = out2d.reshape(-1)
    if n_tail:
        # <128-element tail: plain XLA multiply, O(128) work, no extra passes
        # over the main body of the array.
        tail = (xf[n_main:].astype(jnp.float32) * scale_f32[0]).astype(dtype)
        out = jnp.concatenate([out, tail])
    return out.reshape(orig_shape)


if __name__ == "__main__":
    key = jax.random.PRNGKey(0)

    # Deterministic parameter init, matching nn.Parameter(FloatTensor([1e-3])).
    scale = jnp.array([0.001], dtype=jnp.float32)

    # Small NCHW input consistent with SAGAN usage.
    x = jax.random.normal(key, (2, 4, 16, 16), dtype=jnp.float32)

    out = scale_layer(x, scale)
    jax.block_until_ready(out)

    # Correctness check against the trivial reference.
    ref = x * scale[0]
    assert out.shape == x.shape and out.dtype == x.dtype
    assert jnp.allclose(out, ref, atol=1e-6, rtol=1e-6)

    # Also exercise a non-128-multiple size to cover the tail path.
    x_odd = jax.random.normal(key, (3, 5, 7, 11), dtype=jnp.float32)
    out_odd = scale_layer(x_odd, scale)
    jax.block_until_ready(out_odd)
    assert jnp.allclose(out_odd, x_odd * scale[0], atol=1e-6, rtol=1e-6)

    print("KERNEL_OK")
</pallas_src>

<mosaic_0001>
module attributes {stable_mosaic.version = 11 : i64} {
  func.func @_scale_kernel(%arg0: i32, %arg1: memref<1xf32, #tpu.memory_space<smem>>, %arg2: memref<8x256xf32, #tpu.memory_space<vmem>>, %arg3: memref<8x256xf32, #tpu.memory_space<vmem>>) attributes {dimension_semantics = [#tpu.dimension_semantics<parallel>], iteration_bounds = array<i64: 1>, scalar_prefetch = 0 : i64, scratch_operands = 0 : i64, tpu.core_type = #tpu.core_type<tc>, window_params = [{transform_indices = @transform_0, window_bounds = array<i64: 1>}, {transform_indices = @transform_1, window_bounds = array<i64: 8, 256>}, {transform_indices = @transform_2, window_bounds = array<i64: 8, 256>}]} {
    %c0 = arith.constant 0 : index
    %c0_0 = arith.constant 0 : index
    %0 = vector.load %arg2[%c0, %c0_0] : memref<8x256xf32, #tpu.memory_space<vmem>>, vector<8x256xf32>
    %c0_1 = arith.constant 0 : index
    %1 = memref.load %arg1[%c0_1] : memref<1xf32, #tpu.memory_space<smem>>
    %2 = vector.broadcast %1 : f32 to vector<8x256xf32>
    %3 = arith.mulf %0, %2 : vector<8x256xf32>
    %c0_2 = arith.constant 0 : index
    %c0_3 = arith.constant 0 : index
    %4 = vector.load %arg3[%c0_2, %c0_3] : memref<8x256xf32, #tpu.memory_space<vmem>>, vector<8x256xf32>
    tpu.vector_store %arg3[%c0_2, %c0_3], %3 {strides = array<i32>} : memref<8x256xf32, #tpu.memory_space<vmem>>, vector<8x256xf32>,
    return
  }
  func.func @transform_0(%arg0: i32) -> i32 {
    %c0_i32 = arith.constant 0 : i32
    %c0_i32_0 = arith.constant 0 : i32
    return %c0_i32 : i32
  }
  func.func @transform_1(%arg0: i32) -> (i32, i32) {
    %c0_i32 = arith.constant 0 : i32
    %c0_i32_0 = arith.constant 0 : i32
    return %arg0, %c0_i32 : i32, i32
  }
  func.func @transform_2(%arg0: i32) -> (i32, i32) {
    %c0_i32 = arith.constant 0 : i32
    %c0_i32_0 = arith.constant 0 : i32
    return %arg0, %c0_i32 : i32, i32
  }
}

</mosaic_0001>

<llo_original>
// kernel: tpu_custom_call.1
$region0: #{tpu_custom_call.1}
  #allocation0 [shape = 'u32[]', space=smem, size = 0x4, offset = 0x4, fixed_abs, tag = 'smem constant byte address 0x4 - core index']
  #allocation1 [shape = 'u32[144,128]{1,0:T(1,128)}', space=vmem, size = 0x12000, scoped, tag = 'internal scratch']
  #allocation2 [shape = 'f32[1]{0:T(128)S(6)}', space=smem, size = 0x200, scoped, tag = 'scoped memory for tpu_custom_call.1']
  %s0 = inlined_call_operand.<no memory space> [shape: f32[1], index: 0, kind: input, shape index: {}]
  %s1 = inlined_call_operand.hbm [shape: f32[8,256], index: 1, kind: input, shape index: {}]
  %s2 = inlined_call_operand.hbm [shape: f32[8,256], index: 2, kind: output, shape index: {}]
  %s3 = sld [smem:[#allocation0]]
  $region22: #{tpu_custom_call.1} parent=0
    _
  %s5 = ssub.s32 1, %s3
  %s6 = scalar_select 0, %s5, %s3
  %7 = sst [smem:[#allocation2]] %s0
  $region1: #{tpu_custom_call.1} parent=0
    #allocation3 [shape = 'u8[8192]{0}', space=vmem, size = 0x2000, scoped, tag = 'input window, operand 1, single buffered']
    #allocation4 [shape = 's32[1]{0}', space=sflag, size = 0x4, scoped, tag = 'scoped memory for tpu_custom_call.1']
    #allocation5 [shape = 's32[1]{0}', space=sflag, size = 0x4, scoped, tag = 'scoped memory for tpu_custom_call.1']
    #allocation6 [shape = 'u8[8192]{0}', space=vmem, size = 0x2000, scoped, tag = 'output window, operand 0, single buffered']
    %8 = vsyncpa [#allocation4], 0
    %9 = vsyncpa [#allocation5], 0
    // Predicated region
    $region2: #{tpu_custom_call.1} parent=1 // pred_check
      _
    $region3: #{tpu_custom_call.1} parent=1 // pred_check_branch
      %11 = sbr.rel (0) target = $region5
    $region4: #{tpu_custom_call.1} parent=1 // pred_region
      _
    $region5: #{tpu_custom_call.1} parent=1 // pred_fallthru
      _
    // Predicated region
    $region6: #{tpu_custom_call.1} parent=1 // pred_check
      _
    $region7: #{tpu_custom_call.1} parent=1 // pred_check_branch
      %13 = sbr.rel (0) target = $region9
    $region8: #{tpu_custom_call.1} parent=1 // pred_region
      %s15 = ssub.s32 256, 256
      %16 = vsyncadd [#allocation4], %s15
      %s18 = sshll.u32 [#allocation3], 4
      %s19 = int_to_ptr.vmem [resolvable:$true] %s18
      %21 = dma.hbm_to_vmem [thread:$0]  %s1, 256, %s19, [#allocation4]
    $region9: #{tpu_custom_call.1} parent=1 // pred_fallthru
      _
    // Predicated region
    $region10: #{tpu_custom_call.1} parent=1 // pred_check
      _
    $region11: #{tpu_custom_call.1} parent=1 // pred_check_branch
      %23 = sbr.rel (0) target = $region13
    $region12: #{tpu_custom_call.1} parent=1 // pred_region
      %24 = dma.done [#allocation4], 256
    $region13: #{tpu_custom_call.1} parent=1 // pred_fallthru
      _
    %v25 = vld [vmem:[#allocation3] sm:$0xff]
    %v26 = vld [vmem:[#allocation3 + $0x8] sm:$0xff]
    %s27 = sld [smem:[#allocation2]]
    %v28 = vstv %s27
    %v29 = vmul.f32 %v25, %v28
    %v30 = vmul.f32 %v26, %v28
    %31 = vst [vmem:[#allocation6] sm:$0xff] %v29
    %32 = vst [vmem:[#allocation6 + $0x8] sm:$0xff] %v30
    // Predicated region
    $region14: #{tpu_custom_call.1} parent=1 // pred_check
      _
    $region15: #{tpu_custom_call.1} parent=1 // pred_check_branch
      %34 = sbr.rel (0) target = $region17
    $region16: #{tpu_custom_call.1} parent=1 // pred_region
      %s36 = ssub.s32 256, 256
      %37 = vsyncadd [#allocation5], %s36
      %s39 = sshll.u32 [#allocation6], 4
      %s40 = int_to_ptr.vmem [resolvable:$true] %s39
      %42 = dma.vmem_to_hbm [thread:$0]  %s40, 256, %s2, [#allocation5]
    $region17: #{tpu_custom_call.1} parent=1 // pred_fallthru
      _
    // Predicated region
    $region18: #{tpu_custom_call.1} parent=1 // pred_check
      _
    $region19: #{tpu_custom_call.1} parent=1 // pred_check_branch
      %44 = sbr.rel (0) target = $region21
    $region20: #{tpu_custom_call.1} parent=1 // pred_region
      %45 = dma.done [#allocation5], 256
    $region21: #{tpu_custom_call.1} parent=1 // pred_fallthru
      _
    %46 = vsyncpa [#allocation4], 1
    %47 = vsyncpa [#allocation5], 1

</llo_original>
